<compile_context>
chip_gen: v7x
topology: tpu7x:2x2x1
jax: 0.10.0
libtpu: 0.0.40
codegen_flags: <defaults>
</compile_context>

<pallas_src>
import functools

import jax
import jax.numpy as jnp
import numpy as np
from jax import lax
from jax.experimental import pallas as pl
from jax.experimental.pallas import tpu as pltpu

_OUT_LANES = 128  # full vreg lane width -> unmasked stores + dense writeback DMA


def _round_up(a, m):
    return (a + m - 1) // m * m


def _fused_kernel(x_ref, w_ref, b_ref, o_ref, *, cin, hw, cout, tb):
    # x_ref: (TB, Cin*H*W)  streamed lane-dense activations
    # w_ref: (Cin, Cout)    wsum * 1/(Ho*Wo)   (tiny, resident)
    # b_ref: (1, Cout)      conv bias + extra bias, pre-added
    # o_ref: (TB, 128)      dense output block (result replicated across lanes)
    w = w_ref[...]                                            # (Cin, Cout)

    # Spatial reduction off the MXU: per-channel static slices, VPU lane-folds +
    # XLU reduce.  Cin is small and static -> unrolled Python loop.
    m = jnp.zeros((tb, cout), jnp.float32)
    for ic in range(cin):
        s_ic = jnp.sum(x_ref[:, ic * hw:(ic + 1) * hw], axis=1, keepdims=True)  # (TB,1)
        m = m + s_ic * w[ic:ic + 1, :]                        # rank-1 VPU update (TB,Cout)
    m = m + b_ref[...]                                        # fused biases

    # logsumexp over channels (exact f32), then *10
    mx = jnp.max(m, axis=1, keepdims=True)                    # (TB,1)
    lse = mx + jnp.log(jnp.sum(jnp.exp(m - mx), axis=1, keepdims=True))

    # Replicate across the full vreg width -> unmasked vst + one contiguous DMA.
    o_ref[...] = jnp.broadcast_to(lse * 10.0, (tb, _OUT_LANES))


def model_forward(x, conv_w, conv_b, bias):
    """x: (B, Cin, H, W) f32; conv_w: (Cin, Cout, K, K); conv_b: (Cout,); bias: (Cout,1,1)."""
    B, Cin, H, W = x.shape
    _, Cout, K, _ = conv_w.shape
    Ho, Wo = H + K - 1, W + K - 1
    HW = H * W
    row = Cin * HW

    # ---- wrapper-side parameter setup (plain JAX glue) ----
    x2 = x.reshape(B, row).astype(jnp.float32)                          # lane-dense, zero-copy
    w_sum = (jnp.sum(conv_w, axis=(2, 3)) / float(Ho * Wo)).astype(jnp.float32)   # (Cin, Cout)
    b_all = (conv_b.reshape(-1) + bias.reshape(-1)).astype(jnp.float32).reshape(1, Cout)

    # ---- tile size: fits a per-block VMEM budget; capped at 512 rows so the narrow
    # (TB,Cout)/(TB,1) intermediates stay near the vreg budget while the activation
    # block is already large enough for >=85% of HBM roofline.
    bytes_per_batch_row = 2 * row * 4 + 2 * _OUT_LANES * 4   # dbl-buffered in + out per row
    budget = 12 * 1024 * 1024
    tb = max(8, min(512, (budget // bytes_per_batch_row) // 8 * 8))
    # TODO(synk): K-split the Cin*H*W axis with a VMEM accumulator if a single
    # (8, Cin*H*W) block ever exceeds the VMEM budget (unreachable for this module).
    tb = min(tb, _round_up(B, 8))
    n_tiles = -(-B // tb)
    if n_tiles > 1 and n_tiles % 2 == 1:        # v7x: even step count keeps both cores busy
        n_tiles += 1
        tb = min(tb, max(8, _round_up(-(-B // n_tiles), 8)))
        n_tiles = -(-B // tb)
    b_pad = n_tiles * tb
    if b_pad != B:
        x2 = jnp.pad(x2, ((0, b_pad - B), (0, 0)))   # padded rows -> finite junk, sliced off

    kernel = functools.partial(_fused_kernel, cin=Cin, hw=HW, cout=Cout, tb=tb)

    out = pl.pallas_call(
        kernel,
        out_shape=jax.ShapeDtypeStruct((b_pad, _OUT_LANES), jnp.float32),
        grid_spec=pltpu.PrefetchScalarGridSpec(
            num_scalar_prefetch=0,
            grid=(n_tiles,),
            in_specs=[
                pl.BlockSpec((tb, row), lambda t: (t, 0)),     # streamed activations
                pl.BlockSpec((Cin, Cout), lambda t: (0, 0)),   # resident tiny weight
                pl.BlockSpec((1, Cout), lambda t: (0, 0)),     # resident fused bias
            ],
            # each grid step owns its own dense output block -> safe "parallel"
            out_specs=pl.BlockSpec((tb, _OUT_LANES), lambda t: (t, 0)),
        ),
        compiler_params=pltpu.CompilerParams(
            dimension_semantics=("parallel",),
            vmem_limit_bytes=32 * 1024 * 1024),
    )(x2, w_sum, b_all)

    return out[:B, :1]


def reference_forward(x, conv_w, conv_b, bias):
    """Full ConvTranspose2d (stride=1, pad=0) + mean/bias + logsumexp*10, in plain JAX."""
    K = conv_w.shape[2]
    w_flip = jnp.flip(conv_w, axis=(2, 3)).transpose(1, 0, 2, 3)   # (Cout, Cin, K, K)
    y = lax.conv_general_dilated(
        x, w_flip, window_strides=(1, 1),
        padding=[(K - 1, K - 1), (K - 1, K - 1)],
        dimension_numbers=("NCHW", "OIHW", "NCHW"),
        precision=lax.Precision.HIGHEST,
    )
    y = y + conv_b[None, :, None, None]
    m = jnp.mean(y, axis=(2, 3)) + bias.reshape(-1)[None, :]       # (B, Cout)
    return jax.scipy.special.logsumexp(m, axis=1, keepdims=True) * 10.0


if __name__ == "__main__":
    B, Cin, Cout, K = 2, 4, 8, 3
    H = W = 16

    key = jax.random.PRNGKey(0)
    k_x, k_w, k_cb, k_b = jax.random.split(key, 4)
    x = jax.random.normal(k_x, (B, Cin, H, W), dtype=jnp.float32)
    conv_w = jax.random.normal(k_w, (Cin, Cout, K, K), dtype=jnp.float32) * 0.1
    conv_b = jax.random.normal(k_cb, (Cout,), dtype=jnp.float32) * 0.1
    bias = jax.random.normal(k_b, (Cout, 1, 1), dtype=jnp.float32)   # bias_shape = (Cout,1,1)

    out = jax.block_until_ready(model_forward(x, conv_w, conv_b, bias))
    ref = jax.block_until_ready(reference_forward(x, conv_w, conv_b, bias))

    assert out.shape == (B, 1), out.shape
    np.testing.assert_allclose(np.asarray(out), np.asarray(ref), rtol=1e-3, atol=1e-3)
    print("KERNEL_OK")
</pallas_src>

<mosaic_0001>
module attributes {stable_mosaic.version = 11 : i64} {
  func.func @_fused_kernel(%arg0: i32, %arg1: memref<8x1024xf32, #tpu.memory_space<vmem>>, %arg2: memref<4x8xf32, #tpu.memory_space<vmem>>, %arg3: memref<1x8xf32, #tpu.memory_space<vmem>>, %arg4: memref<8x128xf32, #tpu.memory_space<vmem>>) attributes {dimension_semantics = [#tpu.dimension_semantics<parallel>], iteration_bounds = array<i64: 1>, scalar_prefetch = 0 : i64, scratch_operands = 0 : i64, tpu.core_type = #tpu.core_type<tc>, window_params = [{transform_indices = @transform_0, window_bounds = array<i64: 8, 1024>}, {pipeline_mode = #tpu.pipeline_mode<synchronous>, transform_indices = @transform_1, window_bounds = array<i64: 4, 8>}, {pipeline_mode = #tpu.pipeline_mode<synchronous>, transform_indices = @transform_2, window_bounds = array<i64: 1, 8>}, {transform_indices = @transform_3, window_bounds = array<i64: 8, 128>}]} {
    %c0 = arith.constant 0 : index
    %c0_0 = arith.constant 0 : index
    %0 = vector.load %arg2[%c0, %c0_0] : memref<4x8xf32, #tpu.memory_space<vmem>>, vector<4x8xf32>
    %cst = arith.constant 0.000000e+00 : f32
    %1 = vector.broadcast %cst : f32 to vector<8x8xf32>
    %c0_1 = arith.constant 0 : index
    %c0_2 = arith.constant 0 : index
    %2 = vector.load %arg1[%c0_1, %c0_2] : memref<8x1024xf32, #tpu.memory_space<vmem>>, vector<8x256xf32>
    %cst_3 = arith.constant dense<0.000000e+00> : vector<8xf32>
    %3 = vector.multi_reduction <add>, %2, %cst_3 [1] : vector<8x256xf32> to vector<8xf32>
    %4 = vector.shape_cast %3 : vector<8xf32> to vector<8x1xf32>
    %5 = vector.extract_strided_slice %0 {offsets = [0, 0], sizes = [1, 8], strides = [1, 1]} : vector<4x8xf32> to vector<1x8xf32>
    %6 = vector.broadcast %4 : vector<8x1xf32> to vector<8x8xf32>
    %7 = vector.broadcast %5 : vector<1x8xf32> to vector<8x8xf32>
    %8 = arith.mulf %6, %7 : vector<8x8xf32>
    %9 = arith.addf %1, %8 : vector<8x8xf32>
    %c0_4 = arith.constant 0 : index
    %c256 = arith.constant 256 : index
    %10 = vector.load %arg1[%c0_4, %c256] : memref<8x1024xf32, #tpu.memory_space<vmem>>, vector<8x256xf32>
    %cst_5 = arith.constant dense<0.000000e+00> : vector<8xf32>
    %11 = vector.multi_reduction <add>, %10, %cst_5 [1] : vector<8x256xf32> to vector<8xf32>
    %12 = vector.shape_cast %11 : vector<8xf32> to vector<8x1xf32>
    %13 = vector.extract_strided_slice %0 {offsets = [1, 0], sizes = [1, 8], strides = [1, 1]} : vector<4x8xf32> to vector<1x8xf32>
    %14 = vector.broadcast %12 : vector<8x1xf32> to vector<8x8xf32>
    %15 = vector.broadcast %13 : vector<1x8xf32> to vector<8x8xf32>
    %16 = arith.mulf %14, %15 : vector<8x8xf32>
    %17 = arith.addf %9, %16 : vector<8x8xf32>
    %c0_6 = arith.constant 0 : index
    %c512 = arith.constant 512 : index
    %18 = vector.load %arg1[%c0_6, %c512] : memref<8x1024xf32, #tpu.memory_space<vmem>>, vector<8x256xf32>
    %cst_7 = arith.constant dense<0.000000e+00> : vector<8xf32>
    %19 = vector.multi_reduction <add>, %18, %cst_7 [1] : vector<8x256xf32> to vector<8xf32>
    %20 = vector.shape_cast %19 : vector<8xf32> to vector<8x1xf32>
    %21 = vector.extract_strided_slice %0 {offsets = [2, 0], sizes = [1, 8], strides = [1, 1]} : vector<4x8xf32> to vector<1x8xf32>
    %22 = vector.broadcast %20 : vector<8x1xf32> to vector<8x8xf32>
    %23 = vector.broadcast %21 : vector<1x8xf32> to vector<8x8xf32>
    %24 = arith.mulf %22, %23 : vector<8x8xf32>
    %25 = arith.addf %17, %24 : vector<8x8xf32>
    %c0_8 = arith.constant 0 : index
    %c768 = arith.constant 768 : index
    %26 = vector.load %arg1[%c0_8, %c768] : memref<8x1024xf32, #tpu.memory_space<vmem>>, vector<8x256xf32>
    %cst_9 = arith.constant dense<0.000000e+00> : vector<8xf32>
    %27 = vector.multi_reduction <add>, %26, %cst_9 [1] : vector<8x256xf32> to vector<8xf32>
    %28 = vector.shape_cast %27 : vector<8xf32> to vector<8x1xf32>
    %29 = vector.extract_strided_slice %0 {offsets = [3, 0], sizes = [1, 8], strides = [1, 1]} : vector<4x8xf32> to vector<1x8xf32>
    %30 = vector.broadcast %28 : vector<8x1xf32> to vector<8x8xf32>
    %31 = vector.broadcast %29 : vector<1x8xf32> to vector<8x8xf32>
    %32 = arith.mulf %30, %31 : vector<8x8xf32>
    %33 = arith.addf %25, %32 : vector<8x8xf32>
    %c0_10 = arith.constant 0 : index
    %c0_11 = arith.constant 0 : index
    %34 = vector.load %arg3[%c0_10, %c0_11] : memref<1x8xf32, #tpu.memory_space<vmem>>, vector<1x8xf32>
    %35 = vector.broadcast %34 : vector<1x8xf32> to vector<8x8xf32>
    %36 = arith.addf %33, %35 : vector<8x8xf32>
    %cst_12 = arith.constant dense<0xFF800000> : vector<8xf32>
    %37 = vector.multi_reduction <maximumf>, %36, %cst_12 [1] : vector<8x8xf32> to vector<8xf32>
    %38 = vector.shape_cast %37 : vector<8xf32> to vector<8x1xf32>
    %39 = vector.broadcast %38 : vector<8x1xf32> to vector<8x8xf32>
    %40 = arith.subf %36, %39 : vector<8x8xf32>
    %41 = math.exp %40 : vector<8x8xf32>
    %cst_13 = arith.constant dense<0.000000e+00> : vector<8xf32>
    %42 = vector.multi_reduction <add>, %41, %cst_13 [1] : vector<8x8xf32> to vector<8xf32>
    %43 = vector.shape_cast %42 : vector<8xf32> to vector<8x1xf32>
    %44 = math.log %43 : vector<8x1xf32>
    %45 = arith.addf %38, %44 : vector<8x1xf32>
    %cst_14 = arith.constant 1.000000e+01 : f32
    %46 = vector.broadcast %cst_14 : f32 to vector<8x1xf32>
    %47 = arith.mulf %45, %46 : vector<8x1xf32>
    %48 = vector.shape_cast %47 : vector<8x1xf32> to vector<8x1xf32>
    %49 = vector.broadcast %48 : vector<8x1xf32> to vector<8x128xf32>
    %c0_15 = arith.constant 0 : index
    %c0_16 = arith.constant 0 : index
    %50 = vector.load %arg4[%c0_15, %c0_16] : memref<8x128xf32, #tpu.memory_space<vmem>>, vector<8x128xf32>
    tpu.vector_store %arg4[%c0_15, %c0_16], %49 {strides = array<i32>} : memref<8x128xf32, #tpu.memory_space<vmem>>, vector<8x128xf32>,
    return
  }
  func.func @transform_0(%arg0: i32) -> (i32, i32) {
    %c0_i32 = arith.constant 0 : i32
    %c0_i32_0 = arith.constant 0 : i32
    return %arg0, %c0_i32 : i32, i32
  }
  func.func @transform_1(%arg0: i32) -> (i32, i32) {
    %c0_i32 = arith.constant 0 : i32
    %c0_i32_0 = arith.constant 0 : i32
    %c0_i32_1 = arith.constant 0 : i32
    return %c0_i32, %c0_i32_0 : i32, i32
  }
  func.func @transform_2(%arg0: i32) -> (i32, i32) {
    %c0_i32 = arith.constant 0 : i32
    %c0_i32_0 = arith.constant 0 : i32
    %c0_i32_1 = arith.constant 0 : i32
    return %c0_i32, %c0_i32_0 : i32, i32
  }
  func.func @transform_3(%arg0: i32) -> (i32, i32) {
    %c0_i32 = arith.constant 0 : i32
    %c0_i32_0 = arith.constant 0 : i32
    return %arg0, %c0_i32 : i32, i32
  }
}

</mosaic_0001>

<llo_original>
// kernel: tpu_custom_call.1
$region0: #{tpu_custom_call.1}
  #allocation0 [shape = 'u32[]', space=smem, size = 0x4, offset = 0x4, fixed_abs, tag = 'smem constant byte address 0x4 - core index']
  #allocation1 [shape = 'u32[144,128]{1,0:T(1,128)}', space=vmem, size = 0x12000, scoped, tag = 'internal scratch']
  %s0 = inlined_call_operand.hbm [shape: f32[8,1024], index: 0, kind: input, shape index: {}]
  %s1 = inlined_call_operand.hbm [shape: f32[4,8], index: 1, kind: input, shape index: {}]
  %s2 = inlined_call_operand.vmem [shape: f32[1,8], index: 2, kind: input, shape index: {}]
  %s3 = inlined_call_operand.hbm [shape: f32[8,128], index: 3, kind: output, shape index: {}]
  %s4 = sld [smem:[#allocation0]]
  $region30: #{tpu_custom_call.1} parent=0
    _
  %s6 = ssub.s32 1, %s4
  %s7 = scalar_select 0, %s6, %s4
  $region1: #{tpu_custom_call.1} parent=0
    #allocation2 [shape = 'u8[32768]{0}', space=vmem, size = 0x8000, scoped, tag = 'input window, operand 0, single buffered']
    #allocation3 [shape = 's32[1]{0}', space=sflag, size = 0x4, scoped, tag = 'scoped memory for tpu_custom_call.1']
    #allocation4 [shape = 's32[1]{0}', space=sflag, size = 0x4, scoped, tag = 'scoped memory for tpu_custom_call.1']
    #allocation5 [shape = 'u8[2048]{0}', space=vmem, size = 0x800, scoped, tag = 'input window, operand 1, single buffered']
    #allocation6 [shape = 's32[1]{0}', space=sflag, size = 0x4, scoped, tag = 'scoped memory for tpu_custom_call.1']
    #allocation7 [shape = 'u8[4096]{0}', space=vmem, size = 0x1000, scoped, tag = 'output window, operand 0, single buffered']
    %8 = vsyncpa [#allocation3], 0
    %9 = vsyncpa [#allocation6], 0
    %10 = vsyncpa [#allocation4], 0
    // Predicated region
    $region2: #{tpu_custom_call.1} parent=1 // pred_check
      _
    $region3: #{tpu_custom_call.1} parent=1 // pred_check_branch
      %12 = sbr.rel (0) target = $region5
    $region4: #{tpu_custom_call.1} parent=1 // pred_region
      %s14 = ssub.s32 1024, 1024
      %15 = vsyncadd [#allocation3], %s14
      %s17 = sshll.u32 [#allocation2], 4
      %s18 = int_to_ptr.vmem [resolvable:$true] %s17
      %20 = dma.hbm_to_vmem [thread:$0]  %s0, 1024, %s18, [#allocation3]
    $region5: #{tpu_custom_call.1} parent=1 // pred_fallthru
      _
    // Predicated region
    $region6: #{tpu_custom_call.1} parent=1 // pred_check
      _
    $region7: #{tpu_custom_call.1} parent=1 // pred_check_branch
      %22 = sbr.rel (0) target = $region9
    $region8: #{tpu_custom_call.1} parent=1 // pred_region
      %s24 = ssub.s32 64, 64
      %25 = vsyncadd [#allocation6], %s24
      %s27 = sshll.u32 [#allocation5], 4
      %s28 = int_to_ptr.vmem [resolvable:$true] %s27
      %30 = dma.hbm_to_vmem [thread:$0]  %s1, 64, %s28, [#allocation6]
    $region9: #{tpu_custom_call.1} parent=1 // pred_fallthru
      _
    // Predicated region
    $region10: #{tpu_custom_call.1} parent=1 // pred_check
      _
    $region11: #{tpu_custom_call.1} parent=1 // pred_check_branch
      %32 = sbr.rel (0) target = $region13
    $region12: #{tpu_custom_call.1} parent=1 // pred_region
      _
    $region13: #{tpu_custom_call.1} parent=1 // pred_fallthru
      _
    // Predicated region
    $region14: #{tpu_custom_call.1} parent=1 // pred_check
      _
    $region15: #{tpu_custom_call.1} parent=1 // pred_check_branch
      %34 = sbr.rel (0) target = $region17
    $region16: #{tpu_custom_call.1} parent=1 // pred_region
      %35 = dma.done [#allocation3], 1024
    $region17: #{tpu_custom_call.1} parent=1 // pred_fallthru
      _
    // Predicated region
    $region18: #{tpu_custom_call.1} parent=1 // pred_check
      _
    $region19: #{tpu_custom_call.1} parent=1 // pred_check_branch
      %37 = sbr.rel (0) target = $region21
    $region20: #{tpu_custom_call.1} parent=1 // pred_region
      %38 = dma.done [#allocation6], 64
    $region21: #{tpu_custom_call.1} parent=1 // pred_fallthru
      _
    %v39 = vld [vmem:[#allocation5] sm:$0xf]
    %v40 = vld [vmem:[#allocation2] sm:$0xff]
    %v41 = vld [vmem:[#allocation2 + $0x8] sm:$0xff]
    %v42 = vadd.f32 %v40, %v41
    %43 = vadd.xlane.f32.xlu0 %v42
    %v44 = vpop.xlane.xlu0 %43
    %v45 = vlaneseq
    %v46 = vshrl.u32 %v45, 7
    %v47 = vsub.s32 0, %v46
    %v48 = vrot.slane %v39, %v47
    %v49 = vmul.f32 %v44, %v48
    %v50 = vadd.f32 %v49, 0.0
    %v51 = vld [vmem:[#allocation2 + $0x10] sm:$0xff]
    %v52 = vld [vmem:[#allocation2 + $0x18] sm:$0xff]
    %v53 = vadd.f32 %v51, %v52
    %54 = vadd.xlane.f32.xlu0 %v53
    %v55 = vpop.xlane.xlu0 %54
    %v56 = vlaneseq
    %v57 = vshrl.u32 %v56, 7
    %v58 = vsub.s32 1, %v57
    %v59 = vrot.slane %v39, %v58
    %v60 = vmul.f32 %v55, %v59
    %v61 = vadd.f32 %v50, %v60
    %v62 = vld [vmem:[#allocation2 + $0x20] sm:$0xff]
    %v63 = vld [vmem:[#allocation2 + $0x28] sm:$0xff]
    %v64 = vadd.f32 %v62, %v63
    %65 = vadd.xlane.f32.xlu0 %v64
    %v66 = vpop.xlane.xlu0 %65
    %v67 = vlaneseq
    %v68 = vshrl.u32 %v67, 7
    %v69 = vsub.s32 2, %v68
    %v70 = vrot.slane %v39, %v69
    %v71 = vmul.f32 %v66, %v70
    %v72 = vadd.f32 %v61, %v71
    %v73 = vld [vmem:[#allocation2 + $0x30] sm:$0xff]
    %v74 = vld [vmem:[#allocation2 + $0x38] sm:$0xff]
    %v75 = vadd.f32 %v73, %v74
    %76 = vadd.xlane.f32.xlu0 %v75
    %v77 = vpop.xlane.xlu0 %76
    %v78 = vlaneseq
    %v79 = vshrl.u32 %v78, 7
    %v80 = vsub.s32 3, %v79
    %v81 = vrot.slane %v39, %v80
    %v82 = vmul.f32 %v77, %v81
    %v83 = vadd.f32 %v72, %v82
    %v84 = vld [vmem:[%s2] sm:$0x1]
    %v86 = vlaneseq
    %v87 = vshrl.u32 %v86, 7
    %v88 = vsub.s32 0, %v87
    %v89 = vrot.slane %v84, %v88
    %v91 = vadd.f32 %v83, %v89
    %vm92 = vcmask 64512
    %v93 = vsel %vm92, %v91, -inf
    %94 = vmax.xlane.f32.xlu0 %v93
    %v95 = vpop.xlane.xlu0 %94
    %v96 = vsub.f32 %v91, %v95
    %v97 = vmul.f32 %v96, 1.442695
    %v98 = vpow.pop %v97
    %v99 = vsel %vm92, %v98, 0.0
    %100 = vadd.xlane.f32.xlu0 %v99
    %v101 = vpop.xlane.xlu0 %100
    %v102 = vlog2.pop %v101
    %v103 = vmul.f32 %v102, 0.6931472
    %v104 = vadd.f32 %v95, %v103
    %v105 = vmul.f32 %v104, 10.0
    %106 = vst [vmem:[#allocation7] sm:$0xff] %v105
    // Predicated region
    $region22: #{tpu_custom_call.1} parent=1 // pred_check
      _
    $region23: #{tpu_custom_call.1} parent=1 // pred_check_branch
      %108 = sbr.rel (0) target = $region25
    $region24: #{tpu_custom_call.1} parent=1 // pred_region
      %s110 = ssub.s32 128, 128
      %111 = vsyncadd [#allocation4], %s110
      %s113 = sshll.u32 [#allocation7], 4
      %s114 = int_to_ptr.vmem [resolvable:$true] %s113
      %116 = dma.vmem_to_hbm [thread:$0]  %s114, 128, %s3, [#allocation4]
    $region25: #{tpu_custom_call.1} parent=1 // pred_fallthru
      _
    // Predicated region
    $region26: #{tpu_custom_call.1} parent=1 // pred_check
      _
    $region27: #{tpu_custom_call.1} parent=1 // pred_check_branch
      %118 = sbr.rel (0) target = $region29
    $region28: #{tpu_custom_call.1} parent=1 // pred_region
      %119 = dma.done [#allocation4], 128
    $region29: #{tpu_custom_call.1} parent=1 // pred_fallthru
      _
    %120 = vsyncpa [#allocation3], 1
    %121 = vsyncpa [#allocation6], 1
    %122 = vsyncpa [#allocation4], 1

</llo_original>
